<compile_context>
chip_gen: v7x
topology: tpu7x:2x2x1
jax: 0.10.0
libtpu: 0.0.40
codegen_flags: <defaults>
</compile_context>

<pallas_src>
import jax
import jax.numpy as jnp
from jax.experimental import pallas as pl
from jax.experimental.pallas import tpu as pltpu


def _sublane_align(itemsize: int) -> int:
    # Sub-32-bit dtypes pack along sublanes: align block rows to the packed tile.
    return {4: 8, 2: 16, 1: 32}.get(int(itemsize), 8)


def _vmem_limit_bytes() -> int:
    cap = 64 << 20  # conservative fallback = v7x physical VMEM
    try:
        cap = int(pltpu.get_tpu_info().vmem_capacity_bytes)
    except Exception:
        pass
    # v7x (64 MiB physical) -> 48 MiB scoped; v5e/v6e (128 MiB) -> 64 MiB.
    return max(32 << 20, min(cap * 3 // 4, 64 << 20))


def _choose_rows(N, R, k, W, Wo, itemsize, vmem_limit):
    """Rows (of the flattened C*Ho axis) per block."""
    align = _sublane_align(itemsize)
    # ~vmem_limit/6 per input slab (8-12 MiB on v6e/v7x, review items 6/7) so
    # double-buffered in+out, the resident sel matrix and f32 temporaries fit.
    target_in = max(1 << 20, min(12 << 20, vmem_limit // 6))
    row_bytes = k * W * itemsize
    rows = max(align, (target_in // max(1, row_bytes)) // align * align)
    if rows >= 256:
        rows = rows // 256 * 256          # keep the MXU LHS row count aligned
    rows = min(rows, R)

    wc = W - (k - 1)
    sel_bytes = wc * Wo * itemsize

    def footprint(r):
        io = 2 * r * (k * W + Wo) * itemsize        # double-buffered in + out
        tmp = 3 * r * W * max(itemsize, 4)          # acc/accw/f32 dot result
        return io + tmp + 2 * sel_bytes

    budget = int(vmem_limit * 0.65)
    while rows > align and footprint(rows) > budget:
        rows = max(align, (rows // 2) // align * align)
    rows = min(rows, R)

    # Make sure both v7x TensorCores get work when N == 1 (review item 12).
    if N * ((R + rows - 1) // rows) < 2 and R > align:
        half = (R + 1) // 2
        rows = min(R, max(align, (half + align - 1) // align * align))
    return rows


def _make_kernel(k, W, Wo, precision):
    wc = W - (k - 1)

    def kernel(x_ref, sel_ref, o_ref):
        x = x_ref[0]                                     # (rows, k*W), W on lanes
        # ---- fold the H window: k contiguous lane chunks (aligned if W%128==0) ----
        acc = x[:, :W]
        for i in range(1, k):
            acc = jnp.maximum(acc, x[:, i * W:(i + 1) * W])
        # ---- fold the W window: k-1 shifted contiguous lane slices ----
        # accw[:, w] = max_j acc[:, w + j]; only lanes w = wo*k are consumed below,
        # and wo*k + j <= W-1, so windows never mix.
        accw = acc[:, :wc]
        for j in range(1, k):
            accw = jnp.maximum(accw, acc[:, j:j + wc])
        # ---- compact lanes w = wo*k -> wo with ONE exact {0,1} selection matmul ----
        # sel is precomputed in the wrapper and stays resident (constant index_map);
        # the MXU is otherwise idle in this HBM-bound kernel.
        # TODO(synk): selection-by-matmul assumes finite inputs (0*inf -> NaN), so
        # +/-inf inputs diverge from PyTorch MaxPool2d and NaNs spread row-wide.
        out = jnp.dot(accw, sel_ref[...],
                      precision=precision,
                      preferred_element_type=jnp.float32)
        o_ref[0] = out.astype(o_ref.dtype)

    return kernel


def maxpool2d_nchw(x_nchw: jax.Array, k: int = 2) -> jax.Array:
    """MP.forward: nn.MaxPool2d(kernel_size=k, stride=k) on an NCHW input."""
    N, C, H, W = x_nchw.shape
    Ho, Wo = H // k, W // k
    assert Ho > 0 and Wo > 0, "input smaller than the pooling window"
    if H % k or W % k:  # PyTorch floor semantics: drop remainder rows/cols
        x_nchw = x_nchw[:, :, : Ho * k, : Wo * k]
        H, W = Ho * k, Wo * k

    dtype = x_nchw.dtype
    itemsize = jnp.dtype(dtype).itemsize
    R = C * Ho
    wc = W - (k - 1)

    vmem_limit = _vmem_limit_bytes()
    rows = _choose_rows(N, R, k, W, Wo, itemsize, vmem_limit)
    n_r = pl.cdiv(R, rows)

    # Exact {0,1} selection matrix: sel[w, o] = 1 iff w == o*k (hoisted; review item 1).
    sel = (jnp.arange(wc, dtype=jnp.int32)[:, None]
           == (jnp.arange(Wo, dtype=jnp.int32) * k)[None, :]).astype(dtype)

    # f32 stays exact through the MXU only at HIGHEST; bf16/f16 are exact at DEFAULT.
    precision = (jax.lax.Precision.HIGHEST if dtype == jnp.float32
                 else jax.lax.Precision.DEFAULT)

    # Free row-major reshape: each row holds the k input rows of one output row.
    x_flat = x_nchw.reshape(N, R, k * W)

    out_flat = pl.pallas_call(
        _make_kernel(k, W, Wo, precision),
        out_shape=jax.ShapeDtypeStruct((N, R, Wo), dtype),
        grid_spec=pltpu.PrefetchScalarGridSpec(
            num_scalar_prefetch=0,
            grid=(N, n_r),
            in_specs=[
                pl.BlockSpec((1, rows, k * W), lambda n, r: (n, r, 0)),
                pl.BlockSpec((wc, Wo), lambda n, r: (0, 0)),   # resident constant
            ],
            out_specs=pl.BlockSpec((1, rows, Wo), lambda n, r: (n, r, 0)),
        ),
        compiler_params=pltpu.CompilerParams(
            dimension_semantics=("parallel", "parallel"),
            vmem_limit_bytes=int(vmem_limit),
        ),
        cost_estimate=pl.CostEstimate(
            flops=int(2 * N * R * wc * Wo + 2 * (k - 1) * N * R * W),
            transcendentals=0,
            bytes_accessed=int((N * C * H * W + N * R * Wo + wc * Wo) * itemsize),
        ),
    )(x_flat, sel)

    return out_flat.reshape(N, C, Ho, Wo)  # free reshape back to NCHW


if __name__ == "__main__":
    key = jax.random.PRNGKey(0)
    k = 2

    # Test 1: the canonical small shape.
    N, C, H, W = 2, 4, 16, 16
    x = jax.random.normal(key, (N, C, H, W), dtype=jnp.float32)
    out = jax.block_until_ready(maxpool2d_nchw(x, k=k))
    ref = jnp.max(x.reshape(N, C, H // k, k, W // k, k), axis=(3, 5))
    assert out.shape == (N, C, H // k, W // k), out.shape
    assert jnp.allclose(out, ref, rtol=1e-5, atol=1e-5), "mismatch (test 1)"

    # Test 2: odd H (floor cropping) + a row count that forces a partial edge block.
    key2 = jax.random.split(key, 2)[1]
    x2 = jax.random.normal(key2, (1, 3, 37, 30), dtype=jnp.float32)
    out2 = jax.block_until_ready(maxpool2d_nchw(x2, k=k))
    x2c = x2[:, :, :36, :30]
    ref2 = jnp.max(x2c.reshape(1, 3, 18, k, 15, k), axis=(3, 5))
    assert out2.shape == (1, 3, 18, 15), out2.shape
    assert jnp.allclose(out2, ref2, rtol=1e-5, atol=1e-5), "mismatch (test 2)"

    print("KERNEL_OK")
</pallas_src>

<mosaic_0001>
module attributes {stable_mosaic.version = 11 : i64} {
  func.func @kernel(%arg0: i32, %arg1: i32, %arg2: memref<1x32x32xf32, #tpu.memory_space<vmem>>, %arg3: memref<15x8xf32, #tpu.memory_space<vmem>>, %arg4: memref<1x32x8xf32, #tpu.memory_space<vmem>>) attributes {dimension_semantics = [#tpu.dimension_semantics<parallel>, #tpu.dimension_semantics<parallel>], iteration_bounds = array<i64: 2, 1>, scalar_prefetch = 0 : i64, scratch_operands = 0 : i64, tpu.core_type = #tpu.core_type<tc>, window_params = [{transform_indices = @transform_0, window_bounds = array<i64: 1, 32, 32>}, {pipeline_mode = #tpu.pipeline_mode<synchronous>, transform_indices = @transform_1, window_bounds = array<i64: 15, 8>}, {transform_indices = @transform_2, window_bounds = array<i64: 1, 32, 8>}]} {
    %c0 = arith.constant 0 : index
    %c0_0 = arith.constant 0 : index
    %c0_1 = arith.constant 0 : index
    %0 = vector.load %arg2[%c0, %c0_0, %c0_1] : memref<1x32x32xf32, #tpu.memory_space<vmem>>, vector<1x32x32xf32>
    %1 = vector.shape_cast %0 : vector<1x32x32xf32> to vector<32x32xf32>
    %2 = vector.extract_strided_slice %1 {offsets = [0, 0], sizes = [32, 16], strides = [1, 1]} : vector<32x32xf32> to vector<32x16xf32>
    %3 = vector.extract_strided_slice %1 {offsets = [0, 16], sizes = [32, 16], strides = [1, 1]} : vector<32x32xf32> to vector<32x16xf32>
    %4 = arith.maximumf %2, %3 : vector<32x16xf32>
    %5 = vector.extract_strided_slice %4 {offsets = [0, 0], sizes = [32, 15], strides = [1, 1]} : vector<32x16xf32> to vector<32x15xf32>
    %6 = vector.extract_strided_slice %4 {offsets = [0, 1], sizes = [32, 15], strides = [1, 1]} : vector<32x16xf32> to vector<32x15xf32>
    %7 = arith.maximumf %5, %6 : vector<32x15xf32>
    %c0_2 = arith.constant 0 : index
    %c0_3 = arith.constant 0 : index
    %8 = vector.load %arg3[%c0_2, %c0_3] : memref<15x8xf32, #tpu.memory_space<vmem>>, vector<15x8xf32>
    %cst = arith.constant dense<0.000000e+00> : vector<32x8xf32>
    %9 = tpu.matmul %7, %8, %cst {dimension_numbers = #tpu.dot_dimension_numbers<[1], [0], [0], [1], [0, 0, 1, 1], [], []>, precision = #tpu.contract_precision<fp32>} : vector<32x15xf32>, vector<15x8xf32>, vector<32x8xf32> -> vector<32x8xf32>
    %c0_4 = arith.constant 0 : index
    %c0_5 = arith.constant 0 : index
    %c0_6 = arith.constant 0 : index
    %10 = vector.load %arg4[%c0_4, %c0_5, %c0_6] : memref<1x32x8xf32, #tpu.memory_space<vmem>>, vector<1x32x8xf32>
    %11 = vector.shape_cast %10 : vector<1x32x8xf32> to vector<32x8xf32>
    %12 = vector.shape_cast %9 : vector<32x8xf32> to vector<1x32x8xf32>
    tpu.vector_store %arg4[%c0_4, %c0_5, %c0_6], %12 {strides = array<i32>} : memref<1x32x8xf32, #tpu.memory_space<vmem>>, vector<1x32x8xf32>,
    return
  }
  func.func @transform_0(%arg0: i32, %arg1: i32) -> (i32, i32, i32) {
    %c0_i32 = arith.constant 0 : i32
    %c0_i32_0 = arith.constant 0 : i32
    return %arg0, %arg1, %c0_i32 : i32, i32, i32
  }
  func.func @transform_1(%arg0: i32, %arg1: i32) -> (i32, i32) {
    %c0_i32 = arith.constant 0 : i32
    %c0_i32_0 = arith.constant 0 : i32
    %c0_i32_1 = arith.constant 0 : i32
    return %c0_i32, %c0_i32_0 : i32, i32
  }
  func.func @transform_2(%arg0: i32, %arg1: i32) -> (i32, i32, i32) {
    %c0_i32 = arith.constant 0 : i32
    %c0_i32_0 = arith.constant 0 : i32
    return %arg0, %arg1, %c0_i32 : i32, i32, i32
  }
}

</mosaic_0001>

<llo_original>
// kernel: tpu_custom_call.1
$region0: #{tpu_custom_call.1}
  #allocation0 [shape = 'u32[]', space=smem, size = 0x4, offset = 0x4, fixed_abs, tag = 'smem constant byte address 0x4 - core index']
  #allocation1 [shape = 'u32[144,128]{1,0:T(1,128)}', space=vmem, size = 0x12000, scoped, tag = 'internal scratch']
  %s0 = inlined_call_operand.hbm [shape: f32[2,32,32], index: 0, kind: input, shape index: {}]
  %s1 = inlined_call_operand.vmem [shape: f32[15,8], index: 1, kind: input, shape index: {}]
  %s2 = inlined_call_operand.vmem [shape: f32[2,32,8], index: 2, kind: output, shape index: {}]
  %s3 = sld [smem:[#allocation0]]
  $region45: #{tpu_custom_call.1} parent=0
    _
  %s5 = ssub.s32 1, %s3
  %s6 = scalar_select 0, %s5, %s3
  $region1: #{tpu_custom_call.1} parent=0
    #allocation2 [shape = 'u8[32768]{0}', space=vmem, size = 0x8000, scoped, tag = 'input window, operand 0']
    #allocation3 [shape = 's32[2]{0}', space=sflag, size = 0x8, scoped, tag = 'scoped memory for tpu_custom_call.1']
    %7 = vsyncpa [#allocation3], 0
    %s8 = scalar_lea.sflag [#allocation3], 1
    %9 = vsyncpa %s8, 0
    loop: start=0, step=1, limit=4
    $region2: #{tpu_custom_call.1} parent=1 // loop_pre_header
      _
    $region3: #{tpu_custom_call.1} parent=1 // loop_header
      %s11 = sphi 0, %s15
      %p12 = scmp.ge.s32.totalorder %s11, 4
      %s18 = sphi 0, %s30
      %s19 = sphi 0, %s26
      %s20 = sphi 0, %s18
      %s21 = sphi 0, %s19
      %s22 = sphi 0, %s20
      %s23 = sphi 0, %s21
      %s35 = sphi 0, %s37
      %s38 = sphi 0, %s35
      %s39 = sphi 0, %s38
      %s55 = sphi 0, %s39
      %s59 = sphi 0, %s59
      %s61 = sphi 0, %s59
      %s62 = sphi 0, %s61
      %s76 = sphi 0, %s62
      %s84 = sphi 0, %s86
      %s87 = sphi 0, %s84
      %s88 = sphi 0, %s87
      %s104 = sphi 0, %s88
    $region4: #{tpu_custom_call.1} parent=1 // loop_header_branch
      %14 = sbr.rel (%p12) target = $region8
    $region5: #{tpu_custom_call.1} parent=1 // loop_body
      %s16 = ssub.s32 %s11, 1
      %s17 = ssub.s32 %s11, 2
      %s24 = sadd.s32 1, %s19
      %p25 = scmp.ge.s32.totalorder %s24, 1
      %s26 = scalar_select %p25, 0, %s24
      %s27 = sadd.s32 1, %s18
      %s28 = scalar_select %p25, %s27, %s18
      %p29 = scmp.ge.s32.totalorder %s28, 2
      %s30 = scalar_select %p29, 0, %s28
      %s31 = ssub.s32 %s18, %s30
      %s32 = ssub.s32 %s19, %s26
      %s33 = sor.u32 %s31, %s32
      %p34 = scmp.eq.s32.totalorder %s33, 0
      %s36 = sadd.s32 %s35, 1
      %s37 = scalar_select %p34, %s35, %s36
      %p40 = pneg %p34
      %p41 = scmp.eq.s32.totalorder %s11, 1
      %p42 = por %p40, %p41
      %p43 = scmp.ne.s32.totalorder %s35, %s38
      %p44 = scmp.eq.s32.totalorder %s11, 0
      %p45 = por %p43, %p44
      %p46 = scmp.ne.s32.totalorder %s35, %s38
      %p47 = scmp.eq.s32.totalorder %s16, 1
      %p48 = por %p46, %p47
      %p49 = scmp.ne.s32.totalorder %s38, %s39
      %p50 = scmp.eq.s32.totalorder %s16, 0
      %p51 = por %p49, %p50
      %p52 = scmp.ne.s32.totalorder %s38, %s39
      %p53 = scmp.eq.s32.totalorder %s17, 1
      %p54 = por %p52, %p53
      %p56 = scmp.ne.s32.totalorder %s39, %s55
      %p57 = scmp.eq.s32.totalorder %s17, 0
      %p58 = por %p56, %p57
      %s60 = sadd.s32 %s59, 1
      %p63 = scmp.eq.s32.totalorder %s11, 1
      %p64 = scmp.ne.s32.totalorder %s59, %s61
      %p65 = scmp.eq.s32.totalorder %s11, 0
      %p66 = por %p64, %p65
      %p67 = scmp.ne.s32.totalorder %s59, %s61
      %p68 = scmp.eq.s32.totalorder %s16, 1
      %p69 = por %p67, %p68
      %p70 = scmp.ne.s32.totalorder %s61, %s62
      %p71 = scmp.eq.s32.totalorder %s16, 0
      %p72 = por %p70, %p71
      %p73 = scmp.ne.s32.totalorder %s61, %s62
      %p74 = scmp.eq.s32.totalorder %s17, 1
      %p75 = por %p73, %p74
      %p77 = scmp.ne.s32.totalorder %s62, %s76
      %p78 = scmp.eq.s32.totalorder %s17, 0
      %p79 = por %p77, %p78
      %s80 = ssub.s32 %s18, %s30
      %s81 = ssub.s32 %s19, %s26
      %s82 = sor.u32 %s80, %s81
      %p83 = scmp.eq.s32.totalorder %s82, 0
      %s85 = sadd.s32 %s84, 1
      %s86 = scalar_select %p83, %s84, %s85
      %p89 = pneg %p83
      %p90 = scmp.eq.s32.totalorder %s11, 1
      %p91 = por %p89, %p90
      %p92 = scmp.ne.s32.totalorder %s84, %s87
      %p93 = scmp.eq.s32.totalorder %s11, 0
      %p94 = por %p92, %p93
      %p95 = scmp.ne.s32.totalorder %s84, %s87
      %p96 = scmp.eq.s32.totalorder %s16, 1
      %p97 = por %p95, %p96
      %p98 = scmp.ne.s32.totalorder %s87, %s88
      %p99 = scmp.eq.s32.totalorder %s16, 0
      %p100 = por %p98, %p99
      %p101 = scmp.ne.s32.totalorder %s87, %s88
      %p102 = scmp.eq.s32.totalorder %s17, 1
      %p103 = por %p101, %p102
      %p105 = scmp.ne.s32.totalorder %s88, %s104
      %p106 = scmp.eq.s32.totalorder %s17, 0
      %p107 = por %p105, %p106
      %p108 = scmp.le.s32.totalorder 1, %s11
      %p109 = scmp.lt.s32.totalorder %s11, 3
      %p110 = pnand %p108, %p109
      %p111 = pneg %p110
      // Predicated region
      $region9: #{tpu_custom_call.1} parent=5 // pred_check
        _
      $region10: #{tpu_custom_call.1} parent=5 // pred_check_branch
        %113 = sbr.rel (%p110) target = $region12
      $region11: #{tpu_custom_call.1} parent=5 // pred_region
        %s114 = ssub.s32 %s11, 1
        // Predicated region
        $region13: #{tpu_custom_call.1} parent=11 // pred_check
          %p115 = pneg %p72
        $region14: #{tpu_custom_call.1} parent=11 // pred_check_branch
          %117 = sbr.rel (%p115) target = $region16
        $region15: #{tpu_custom_call.1} parent=11 // pred_region
          _
        $region16: #{tpu_custom_call.1} parent=11 // pred_fallthru
          _
      $region12: #{tpu_custom_call.1} parent=5 // pred_fallthru
        _
      %p118 = scmp.lt.s32.totalorder %s11, 2
      // Predicated region
      $region17: #{tpu_custom_call.1} parent=5 // pred_check
        %p119 = pneg %p118
      $region18: #{tpu_custom_call.1} parent=5 // pred_check_branch
        %121 = sbr.rel (%p119) target = $region20
      $region19: #{tpu_custom_call.1} parent=5 // pred_region
        // Predicated region
        $region21: #{tpu_custom_call.1} parent=19 // pred_check
          %p122 = pneg %p45
        $region22: #{tpu_custom_call.1} parent=19 // pred_check_branch
          %124 = sbr.rel (%p122) target = $region24
        $region23: #{tpu_custom_call.1} parent=19 // pred_region
          %s125 = sand.u32 %s35, 1
          %s126 = scalar_lea.sflag [#allocation3], %s125
          %s127 = sand.u32 %s35, 1
          %s128 = smul.addr %s127, 32
          %s129 = scalar_lea.vmem [#allocation2], %s128
          %s130 = smul.u32 4, %s19
          %s132 = ssub.s32 512, 512
          %133 = vsyncadd %s126, %s132
          %s134 = smul.addr %s18, 4
          %s135 = sadd.s32 %s130, %s134
          %s136 = smul.addr %s135, 128
          %s137 = scalar_lea.hbm %s0, %s136
          %s138 = sshll.u32 %s129, 4
          %s139 = int_to_ptr.vmem [resolvable:$true] %s138
          %144 = dma.hbm_to_vmem [thread:$0]  %s137, 512, %s139, %s126, 128, 128, 8
        $region24: #{tpu_custom_call.1} parent=19 // pred_fallthru
          _
      $region20: #{tpu_custom_call.1} parent=5 // pred_fallthru
        _
      %p145 = scmp.le.s32.totalorder 1, %s11
      %p146 = scmp.lt.s32.totalorder %s11, 3
      %p147 = pnand %p145, %p146
      %p148 = pneg %p147
      // Predicated region
      $region25: #{tpu_custom_call.1} parent=5 // pred_check
        _
      $region26: #{tpu_custom_call.1} parent=5 // pred_check_branch
        %150 = sbr.rel (%p147) target = $region28
      $region27: #{tpu_custom_call.1} parent=5 // pred_region
        %s151 = ssub.s32 %s11, 1
        %s152 = sand.u32 %s38, 1
        %s153 = scalar_lea.sflag [#allocation3], %s152
        %s154 = sand.u32 %s38, 1
        %s155 = smul.addr %s154, 32
        %s156 = scalar_lea.vmem [#allocation2], %s155
        // Predicated region
        $region29: #{tpu_custom_call.1} parent=27 // pred_check
          %p157 = pneg %p51
        $region30: #{tpu_custom_call.1} parent=27 // pred_check_branch
          %159 = sbr.rel (%p157) target = $region32
        $region31: #{tpu_custom_call.1} parent=27 // pred_region
          %160 = dma.done %s153, 512
        $region32: #{tpu_custom_call.1} parent=27 // pred_fallthru
          _
        %s161 = sand.u32 %s38, 1
        %s162 = scalar_lea.sflag [#allocation3], %s161
        %s163 = sand.u32 %s38, 1
        %s164 = smul.addr %s163, 32
        %s165 = scalar_lea.vmem [#allocation2], %s164
        %p166 = pneg %p51
        %p167 = pneg %p48
        %p168 = pneg %p72
        %p169 = pneg %p69
        %p170 = pneg %p100
        %p171 = pneg %p97
        %s172 = smul.u32 4, %s21
        %p173 = scmp.lt.s32.totalorder %s20, 1
        %s174 = scalar_select %p173, %s20, 1
        %p175 = scmp.lt.s32.totalorder %s172, 3
        %s176 = scalar_select %p175, %s172, 3
        %s177 = smul.addr %s174, 4
        %s178 = sadd.s32 %s176, %s177
        %s179 = smul.addr %s178, 8
        %s180 = scalar_lea.vmem %s2, %s179
        %s181 = smul.u32 4, %s21
        %s182 = smul.u32 4, %s21
        %p183 = scmp.lt.s32.totalorder %s20, 1
        %s184 = scalar_select %p183, %s20, 1
        %p185 = scmp.lt.s32.totalorder %s182, 3
        %s186 = scalar_select %p185, %s182, 3
        %s187 = smul.addr %s184, 4
        %s188 = sadd.s32 %s186, %s187
        %s189 = smul.addr %s188, 8
        %s190 = scalar_lea.vmem %s2, %s189
        %s191 = smul.u32 4, %s21
        %v192 = vld [vmem:[%s156] sm:$0xff]
        %v193 = vld [vmem:[%s156 + $0x8] sm:$0xff]
        %v194 = vld [vmem:[%s156 + $0x10] sm:$0xff]
        %v195 = vld [vmem:[%s156 + $0x18] sm:$0xff]
        %200 = vrot.lane.b32.xlu0 %v192, 112
        %v201 = vpop.permute.xlu0 %200
        %202 = vrot.lane.b32.xlu0 %v193, 112
        %v203 = vpop.permute.xlu0 %202
        %204 = vrot.lane.b32.xlu0 %v194, 112
        %v205 = vpop.permute.xlu0 %204
        %206 = vrot.lane.b32.xlu0 %v195, 112
        %v207 = vpop.permute.xlu0 %206
        %v212 = vmax.f32 %v192, %v201
        %v213 = vmax.f32 %v193, %v203
        %v214 = vmax.f32 %v194, %v205
        %v215 = vmax.f32 %v195, %v207
        %220 = vrot.lane.b32.xlu0 %v212, 127
        %v221 = vpop.permute.xlu0 %220
        %222 = vrot.lane.b32.xlu0 %v213, 127
        %v223 = vpop.permute.xlu0 %222
        %224 = vrot.lane.b32.xlu0 %v214, 127
        %v225 = vpop.permute.xlu0 %224
        %226 = vrot.lane.b32.xlu0 %v215, 127
        %v227 = vpop.permute.xlu0 %226
        %v232 = vmax.f32 %v212, %v221
        %v233 = vmax.f32 %v213, %v223
        %v234 = vmax.f32 %v214, %v225
        %v235 = vmax.f32 %v215, %v227
        %v236 = vld [vmem:[%s1] sm:$0xff]
        %v237 = vld [vmem:[%s1 + $0x8] sm:$0x7f]
        %vm238 = vcmask 121856
        %v240 = vsel %vm238, %v232, 0
        %v243 = vsel %vm238, %v233, 0
        %v246 = vsel %vm238, %v234, 0
        %v249 = vsel %vm238, %v235, 0
        %vm251 = vcmask 1046528
        %v253 = vsel %vm251, %v237, 0
        %255 = vmatprep.subr.mxu0 0.0
        %v256 = vand.u32 %v236, 4294901760
        %257 = vmatpush1.msra.mxu0 %v256
        %258 = vmatprep.subr.mxu0 0.0
        %v259 = vand.u32 %v253, 4294901760
        %260 = vmatpush1.msra.mxu0 %v259
        %261 = vmatprep.subr.mxu0 0.0
        %262 = vmatpush1.msra.mxu0 0.0
        %263 = vmatprep.subr.mxu0 0.0
        %264 = vmatpush1.msra.mxu0 0.0
        %265 = vmatprep.subr.mxu0 0.0
        %266 = vmatpush1.msra.mxu0 0.0
        %267 = vmatprep.subr.mxu0 0.0
        %268 = vmatpush1.msra.mxu0 0.0
        %269 = vmatprep.subr.mxu0 0.0
        %270 = vmatpush1.msra.mxu0 0.0
        %271 = vmatprep.subr.mxu0 0.0
        %272 = vmatpush1.msra.mxu0 0.0
        %273 = vmatprep.subr.mxu0 0.0
        %274 = vmatpush1.msra.mxu0 0.0
        %275 = vmatprep.subr.mxu0 0.0
        %276 = vmatpush1.msra.mxu0 0.0
        %277 = vmatprep.subr.mxu0 0.0
        %278 = vmatpush1.msra.mxu0 0.0
        %279 = vmatprep.subr.mxu0 0.0
        %280 = vmatpush1.msra.mxu0 0.0
        %281 = vmatprep.subr.mxu0 0.0
        %282 = vmatpush1.msra.mxu0 0.0
        %283 = vmatprep.subr.mxu0 0.0
        %284 = vmatpush1.msra.mxu0 0.0
        %285 = vmatprep.subr.mxu0 0.0
        %286 = vmatpush1.msra.mxu0 0.0
        %287 = vmatprep.subr.mxu0 0.0
        %288 = vmatpush1.msra.mxu0 0.0
        %289 = vmatprep.subr.mxu0 0.0
        %290 = vmatpush1.msra.mxu0 0.0
        %291 = vmatprep.subr.mxu0 0.0
        %292 = vmatpush1.msra.mxu0 0.0
        %293 = vmatprep.subr.mxu0 0.0
        %294 = vmatpush1.msra.mxu0 0.0
        %295 = vmatprep.subr.mxu0 0.0
        %296 = vmatpush1.msra.mxu0 0.0
        %297 = vmatprep.subr.mxu0 0.0
        %298 = vmatpush1.msra.mxu0 0.0
        %299 = vmatprep.subr.mxu0 0.0
        %300 = vmatpush1.msra.mxu0 0.0
        %301 = vmatprep.subr.mxu0 0.0
        %302 = vmatpush1.msra.mxu0 0.0
        %303 = vmatprep.subr.mxu0 0.0
        %304 = vmatpush1.msra.mxu0 0.0
        %305 = vmatprep.subr.mxu0 0.0
        %306 = vmatpush1.msra.mxu0 0.0
        %307 = vmatprep.subr.mxu0 0.0
        %308 = vmatpush1.msra.mxu0 0.0
        %309 = vmatprep.subr.mxu0 0.0
        %310 = vmatpush1.msra.mxu0 0.0
        %311 = vmatprep.subr.mxu0 0.0
        %312 = vmatpush1.msra.mxu0 0.0
        %313 = vmatprep.subr.mxu0 0.0
        %314 = vmatpush1.msra.mxu0 0.0
        %315 = vmatprep.subr.mxu0 0.0
        %316 = vmatpush1.msra.mxu0 0.0
        %317 = vmatprep.subr.mxu0 0.0
        %318 = vmatpush1.msra.mxu0 0.0
        %319 = vmatprep.subr.mxu0 0.0
        %320 = vmatpush1.msra.mxu0 0.0
        %321 = vmatprep.mubr.f32.mxu0 0.0
        %v322 = vand.u32 %v240, 4294901760
        %v323 = vsub.f32 %v240, %v322
        %v324 = vand.u32 %v323, 4294901760
        %v325 = vsub.f32 %v323, %v324
        %v326 = vand.u32 %v325, 4294901760
        %327 = vmatmul.mubr.f32.gmra.mrb[0].mxu0 %v326
        %v328 = vpop.f32.mrb[0].mxu0
        %v329 = vadd.f32 0.0, %v328
        %v330 = vpop.f32.mrb[0].mxu0
        %331 = vmatprep.mubr.f32.mxu0 0.0
        %v332 = vand.u32 %v243, 4294901760
        %v333 = vsub.f32 %v243, %v332
        %v334 = vand.u32 %v333, 4294901760
        %v335 = vsub.f32 %v333, %v334
        %v336 = vand.u32 %v335, 4294901760
        %337 = vmatmul.mubr.f32.gmra.mrb[0].mxu0 %v336
        %v338 = vpop.f32.mrb[0].mxu0
        %v339 = vadd.f32 0.0, %v338
        %v340 = vpop.f32.mrb[0].mxu0
        %341 = vmatprep.mubr.f32.mxu0 0.0
        %v342 = vand.u32 %v246, 4294901760
        %v343 = vsub.f32 %v246, %v342
        %v344 = vand.u32 %v343, 4294901760
        %v345 = vsub.f32 %v343, %v344
        %v346 = vand.u32 %v345, 4294901760
        %347 = vmatmul.mubr.f32.gmra.mrb[0].mxu0 %v346
        %v348 = vpop.f32.mrb[0].mxu0
        %v349 = vadd.f32 0.0, %v348
        %v350 = vpop.f32.mrb[0].mxu0
        %351 = vmatprep.mubr.f32.mxu0 0.0
        %v352 = vand.u32 %v249, 4294901760
        %v353 = vsub.f32 %v249, %v352
        %v354 = vand.u32 %v353, 4294901760
        %v355 = vsub.f32 %v353, %v354
        %v356 = vand.u32 %v355, 4294901760
        %357 = vmatmul.mubr.f32.gmra.mrb[0].mxu0 %v356
        %v358 = vpop.f32.mrb[0].mxu0
        %v359 = vadd.f32 0.0, %v358
        %v360 = vpop.f32.mrb[0].mxu0
        %361 = vdwg.mxu0
        %362 = vmatprep.subr.mxu0 0.0
        %v363 = vand.u32 %v236, 4294901760
        %v364 = vsub.f32 %v236, %v363
        %v365 = vand.u32 %v364, 4294901760
        %v366 = vsub.f32 %v364, %v365
        %v367 = vand.u32 %v366, 4294901760
        %368 = vmatpush1.msra.mxu0 %v367
        %369 = vmatprep.subr.mxu0 0.0
        %v370 = vand.u32 %v253, 4294901760
        %v371 = vsub.f32 %v253, %v370
        %v372 = vand.u32 %v371, 4294901760
        %v373 = vsub.f32 %v371, %v372
        %v374 = vand.u32 %v373, 4294901760
        %375 = vmatpush1.msra.mxu0 %v374
        %376 = vmatprep.subr.mxu0 0.0
        %377 = vmatpush1.msra.mxu0 0.0
        %378 = vmatprep.subr.mxu0 0.0
        %379 = vmatpush1.msra.mxu0 0.0
        %380 = vmatprep.subr.mxu0 0.0
        %381 = vmatpush1.msra.mxu0 0.0
        %382 = vmatprep.subr.mxu0 0.0
        %383 = vmatpush1.msra.mxu0 0.0
        %384 = vmatprep.subr.mxu0 0.0
        %385 = vmatpush1.msra.mxu0 0.0
        %386 = vmatprep.subr.mxu0 0.0
        %387 = vmatpush1.msra.mxu0 0.0
        %388 = vmatprep.subr.mxu0 0.0
        %389 = vmatpush1.msra.mxu0 0.0
        %390 = vmatprep.subr.mxu0 0.0
        %391 = vmatpush1.msra.mxu0 0.0
        %392 = vmatprep.subr.mxu0 0.0
        %393 = vmatpush1.msra.mxu0 0.0
        %394 = vmatprep.subr.mxu0 0.0
        %395 = vmatpush1.msra.mxu0 0.0
        %396 = vmatprep.subr.mxu0 0.0
        %397 = vmatpush1.msra.mxu0 0.0
        %398 = vmatprep.subr.mxu0 0.0
        %399 = vmatpush1.msra.mxu0 0.0
        %400 = vmatprep.subr.mxu0 0.0
        %401 = vmatpush1.msra.mxu0 0.0
        %402 = vmatprep.subr.mxu0 0.0
        %403 = vmatpush1.msra.mxu0 0.0
        %404 = vmatprep.subr.mxu0 0.0
        %405 = vmatpush1.msra.mxu0 0.0
        %406 = vmatprep.subr.mxu0 0.0
        %407 = vmatpush1.msra.mxu0 0.0
        %408 = vmatprep.subr.mxu0 0.0
        %409 = vmatpush1.msra.mxu0 0.0
        %410 = vmatprep.subr.mxu0 0.0
        %411 = vmatpush1.msra.mxu0 0.0
        %412 = vmatprep.subr.mxu0 0.0
        %413 = vmatpush1.msra.mxu0 0.0
        %414 = vmatprep.subr.mxu0 0.0
        %415 = vmatpush1.msra.mxu0 0.0
        %416 = vmatprep.subr.mxu0 0.0
        %417 = vmatpush1.msra.mxu0 0.0
        %418 = vmatprep.subr.mxu0 0.0
        %419 = vmatpush1.msra.mxu0 0.0
        %420 = vmatprep.subr.mxu0 0.0
        %421 = vmatpush1.msra.mxu0 0.0
        %422 = vmatprep.subr.mxu0 0.0
        %423 = vmatpush1.msra.mxu0 0.0
        %424 = vmatprep.subr.mxu0 0.0
        %425 = vmatpush1.msra.mxu0 0.0
        %426 = vmatprep.subr.mxu0 0.0
        %427 = vmatpush1.msra.mxu0 0.0
        %428 = vmatprep.subr.mxu0 0.0
        %429 = vmatpush1.msra.mxu0 0.0
        %430 = vmatprep.subr.mxu0 0.0
        %431 = vmatpush1.msra.mxu0 0.0
        %432 = vmatprep.subr.mxu0 0.0
        %433 = vmatpush1.msra.mxu0 0.0
        %434 = vmatprep.subr.mxu0 0.0
        %435 = vmatpush1.msra.mxu0 0.0
        %436 = vmatprep.mubr.f32.mxu0 0.0
        %v437 = vand.u32 %v240, 4294901760
        %438 = vmatmul.mubr.f32.gmra.mrb[0].mxu0 %v437
        %v439 = vpop.f32.mrb[0].mxu0
        %v440 = vadd.f32 %v329, %v439
        %v441 = vpop.f32.mrb[0].mxu0
        %442 = vmatprep.mubr.f32.mxu0 0.0
        %v443 = vand.u32 %v243, 4294901760
        %444 = vmatmul.mubr.f32.gmra.mrb[0].mxu0 %v443
        %v445 = vpop.f32.mrb[0].mxu0
        %v446 = vadd.f32 %v339, %v445
        %v447 = vpop.f32.mrb[0].mxu0
        %448 = vmatprep.mubr.f32.mxu0 0.0
        %v449 = vand.u32 %v246, 4294901760
        %450 = vmatmul.mubr.f32.gmra.mrb[0].mxu0 %v449
        %v451 = vpop.f32.mrb[0].mxu0
        %v452 = vadd.f32 %v349, %v451
        %v453 = vpop.f32.mrb[0].mxu0
        %454 = vmatprep.mubr.f32.mxu0 0.0
        %v455 = vand.u32 %v249, 4294901760
        %456 = vmatmul.mubr.f32.gmra.mrb[0].mxu0 %v455
        %v457 = vpop.f32.mrb[0].mxu0
        %v458 = vadd.f32 %v359, %v457
        %v459 = vpop.f32.mrb[0].mxu0
        %460 = vdwg.mxu0
        %461 = vmatprep.subr.mxu0 0.0
        %v462 = vand.u32 %v236, 4294901760
        %v463 = vsub.f32 %v236, %v462
        %464 = vmatpush1.msra.mxu0 %v463
        %465 = vmatprep.subr.mxu0 0.0
        %v466 = vand.u32 %v253, 4294901760
        %v467 = vsub.f32 %v253, %v466
        %468 = vmatpush1.msra.mxu0 %v467
        %469 = vmatprep.subr.mxu0 0.0
        %470 = vmatpush1.msra.mxu0 0.0
        %471 = vmatprep.subr.mxu0 0.0
        %472 = vmatpush1.msra.mxu0 0.0
        %473 = vmatprep.subr.mxu0 0.0
        %474 = vmatpush1.msra.mxu0 0.0
        %475 = vmatprep.subr.mxu0 0.0
        %476 = vmatpush1.msra.mxu0 0.0
        %477 = vmatprep.subr.mxu0 0.0
        %478 = vmatpush1.msra.mxu0 0.0
        %479 = vmatprep.subr.mxu0 0.0
        %480 = vmatpush1.msra.mxu0 0.0
        %481 = vmatprep.subr.mxu0 0.0
        %482 = vmatpush1.msra.mxu0 0.0
        %483 = vmatprep.subr.mxu0 0.0
        %484 = vmatpush1.msra.mxu0 0.0
        %485 = vmatprep.subr.mxu0 0.0
        %486 = vmatpush1.msra.mxu0 0.0
        %487 = vmatprep.subr.mxu0 0.0
        %488 = vmatpush1.msra.mxu0 0.0
        %489 = vmatprep.subr.mxu0 0.0
        %490 = vmatpush1.msra.mxu0 0.0
        %491 = vmatprep.subr.mxu0 0.0
        %492 = vmatpush1.msra.mxu0 0.0
        %493 = vmatprep.subr.mxu0 0.0
        %494 = vmatpush1.msra.mxu0 0.0
        %495 = vmatprep.subr.mxu0 0.0
        %496 = vmatpush1.msra.mxu0 0.0
        %497 = vmatprep.subr.mxu0 0.0
        %498 = vmatpush1.msra.mxu0 0.0
        %499 = vmatprep.subr.mxu0 0.0
        %500 = vmatpush1.msra.mxu0 0.0
        %501 = vmatprep.subr.mxu0 0.0
        %502 = vmatpush1.msra.mxu0 0.0
        %503 = vmatprep.subr.mxu0 0.0
        %504 = vmatpush1.msra.mxu0 0.0
        %505 = vmatprep.subr.mxu0 0.0
        %506 = vmatpush1.msra.mxu0 0.0
        %507 = vmatprep.subr.mxu0 0.0
        %508 = vmatpush1.msra.mxu0 0.0
        %509 = vmatprep.subr.mxu0 0.0
        %510 = vmatpush1.msra.mxu0 0.0
        %511 = vmatprep.subr.mxu0 0.0
        %512 = vmatpush1.msra.mxu0 0.0
        %513 = vmatprep.subr.mxu0 0.0
        %514 = vmatpush1.msra.mxu0 0.0
        %515 = vmatprep.subr.mxu0 0.0
        %516 = vmatpush1.msra.mxu0 0.0
        %517 = vmatprep.subr.mxu0 0.0
        %518 = vmatpush1.msra.mxu0 0.0
        %519 = vmatprep.subr.mxu0 0.0
        %520 = vmatpush1.msra.mxu0 0.0
        %521 = vmatprep.subr.mxu0 0.0
        %522 = vmatpush1.msra.mxu0 0.0
        %523 = vmatprep.subr.mxu0 0.0
        %524 = vmatpush1.msra.mxu0 0.0
        %525 = vmatprep.subr.mxu0 0.0
        %526 = vmatpush1.msra.mxu0 0.0
        %527 = vmatprep.subr.mxu0 0.0
        %528 = vmatpush1.msra.mxu0 0.0
        %529 = vmatprep.mubr.f32.mxu0 0.0
        %v530 = vand.u32 %v240, 4294901760
        %v531 = vsub.f32 %v240, %v530
        %532 = vmatmul.mubr.f32.gmra.mrb[0].mxu0 %v531
        %v533 = vpop.f32.mrb[0].mxu0
        %v534 = vadd.f32 %v440, %v533
        %v535 = vpop.f32.mrb[0].mxu0
        %536 = vmatprep.mubr.f32.mxu0 0.0
        %v537 = vand.u32 %v243, 4294901760
        %v538 = vsub.f32 %v243, %v537
        %539 = vmatmul.mubr.f32.gmra.mrb[0].mxu0 %v538
        %v540 = vpop.f32.mrb[0].mxu0
        %v541 = vadd.f32 %v446, %v540
        %v542 = vpop.f32.mrb[0].mxu0
        %543 = vmatprep.mubr.f32.mxu0 0.0
        %v544 = vand.u32 %v246, 4294901760
        %v545 = vsub.f32 %v246, %v544
        %546 = vmatmul.mubr.f32.gmra.mrb[0].mxu0 %v545
        %v547 = vpop.f32.mrb[0].mxu0
        %v548 = vadd.f32 %v452, %v547
        %v549 = vpop.f32.mrb[0].mxu0
        %550 = vmatprep.mubr.f32.mxu0 0.0
        %v551 = vand.u32 %v249, 4294901760
        %v552 = vsub.f32 %v249, %v551
        %553 = vmatmul.mubr.f32.gmra.mrb[0].mxu0 %v552
        %v554 = vpop.f32.mrb[0].mxu0
        %v555 = vadd.f32 %v458, %v554
        %v556 = vpop.f32.mrb[0].mxu0
        %557 = vdwg.mxu0
        %558 = vmatprep.subr.mxu0 0.0
        %v559 = vand.u32 %v236, 4294901760
        %560 = vmatpush1.msra.mxu0 %v559
        %561 = vmatprep.subr.mxu0 0.0
        %v562 = vand.u32 %v253, 4294901760
        %563 = vmatpush1.msra.mxu0 %v562
        %564 = vmatprep.subr.mxu0 0.0
        %565 = vmatpush1.msra.mxu0 0.0
        %566 = vmatprep.subr.mxu0 0.0
        %567 = vmatpush1.msra.mxu0 0.0
        %568 = vmatprep.subr.mxu0 0.0
        %569 = vmatpush1.msra.mxu0 0.0
        %570 = vmatprep.subr.mxu0 0.0
        %571 = vmatpush1.msra.mxu0 0.0
        %572 = vmatprep.subr.mxu0 0.0
        %573 = vmatpush1.msra.mxu0 0.0
        %574 = vmatprep.subr.mxu0 0.0
        %575 = vmatpush1.msra.mxu0 0.0
        %576 = vmatprep.subr.mxu0 0.0
        %577 = vmatpush1.msra.mxu0 0.0
        %578 = vmatprep.subr.mxu0 0.0
        %579 = vmatpush1.msra.mxu0 0.0
        %580 = vmatprep.subr.mxu0 0.0
        %581 = vmatpush1.msra.mxu0 0.0
        %582 = vmatprep.subr.mxu0 0.0
        %583 = vmatpush1.msra.mxu0 0.0
        %584 = vmatprep.subr.mxu0 0.0
        %585 = vmatpush1.msra.mxu0 0.0
        %586 = vmatprep.subr.mxu0 0.0
        %587 = vmatpush1.msra.mxu0 0.0
        %588 = vmatprep.subr.mxu0 0.0
        %589 = vmatpush1.msra.mxu0 0.0
        %590 = vmatprep.subr.mxu0 0.0
        %591 = vmatpush1.msra.mxu0 0.0
        %592 = vmatprep.subr.mxu0 0.0
        %593 = vmatpush1.msra.mxu0 0.0
        %594 = vmatprep.subr.mxu0 0.0
        %595 = vmatpush1.msra.mxu0 0.0
        %596 = vmatprep.subr.mxu0 0.0
        %597 = vmatpush1.msra.mxu0 0.0
        %598 = vmatprep.subr.mxu0 0.0
        %599 = vmatpush1.msra.mxu0 0.0
        %600 = vmatprep.subr.mxu0 0.0
        %601 = vmatpush1.msra.mxu0 0.0
        %602 = vmatprep.subr.mxu0 0.0
        %603 = vmatpush1.msra.mxu0 0.0
        %604 = vmatprep.subr.mxu0 0.0
        %605 = vmatpush1.msra.mxu0 0.0
        %606 = vmatprep.subr.mxu0 0.0
        %607 = vmatpush1.msra.mxu0 0.0
        %608 = vmatprep.subr.mxu0 0.0
        %609 = vmatpush1.msra.mxu0 0.0
        %610 = vmatprep.subr.mxu0 0.0
        %611 = vmatpush1.msra.mxu0 0.0
        %612 = vmatprep.subr.mxu0 0.0
        %613 = vmatpush1.msra.mxu0 0.0
        %614 = vmatprep.subr.mxu0 0.0
        %615 = vmatpush1.msra.mxu0 0.0
        %616 = vmatprep.subr.mxu0 0.0
        %617 = vmatpush1.msra.mxu0 0.0
        %618 = vmatprep.subr.mxu0 0.0
        %619 = vmatpush1.msra.mxu0 0.0
        %620 = vmatprep.subr.mxu0 0.0
        %621 = vmatpush1.msra.mxu0 0.0
        %622 = vmatprep.subr.mxu0 0.0
        %623 = vmatpush1.msra.mxu0 0.0
        %624 = vmatprep.mubr.f32.mxu0 0.0
        %v625 = vand.u32 %v240, 4294901760
        %v626 = vsub.f32 %v240, %v625
        %v627 = vand.u32 %v626, 4294901760
        %628 = vmatmul.mubr.f32.gmra.mrb[0].mxu0 %v627
        %v629 = vpop.f32.mrb[0].mxu0
        %v630 = vadd.f32 %v534, %v629
        %v631 = vpop.f32.mrb[0].mxu0
        %632 = vmatprep.mubr.f32.mxu0 0.0
        %v633 = vand.u32 %v243, 4294901760
        %v634 = vsub.f32 %v243, %v633
        %v635 = vand.u32 %v634, 4294901760
        %636 = vmatmul.mubr.f32.gmra.mrb[0].mxu0 %v635
        %v637 = vpop.f32.mrb[0].mxu0
        %v638 = vadd.f32 %v541, %v637
        %v639 = vpop.f32.mrb[0].mxu0
        %640 = vmatprep.mubr.f32.mxu0 0.0
        %v641 = vand.u32 %v246, 4294901760
        %v642 = vsub.f32 %v246, %v641
        %v643 = vand.u32 %v642, 4294901760
        %644 = vmatmul.mubr.f32.gmra.mrb[0].mxu0 %v643
        %v645 = vpop.f32.mrb[0].mxu0
        %v646 = vadd.f32 %v548, %v645
        %v647 = vpop.f32.mrb[0].mxu0
        %648 = vmatprep.mubr.f32.mxu0 0.0
        %v649 = vand.u32 %v249, 4294901760
        %v650 = vsub.f32 %v249, %v649
        %v651 = vand.u32 %v650, 4294901760
        %652 = vmatmul.mubr.f32.gmra.mrb[0].mxu0 %v651
        %v653 = vpop.f32.mrb[0].mxu0
        %v654 = vadd.f32 %v555, %v653
        %v655 = vpop.f32.mrb[0].mxu0
        %656 = vdwg.mxu0
        %657 = vmatprep.subr.mxu0 0.0
        %v658 = vand.u32 %v236, 4294901760
        %v659 = vsub.f32 %v236, %v658
        %v660 = vand.u32 %v659, 4294901760
        %661 = vmatpush1.msra.mxu0 %v660
        %662 = vmatprep.subr.mxu0 0.0
        %v663 = vand.u32 %v253, 4294901760
        %v664 = vsub.f32 %v253, %v663
        %v665 = vand.u32 %v664, 4294901760
        %666 = vmatpush1.msra.mxu0 %v665
        %667 = vmatprep.subr.mxu0 0.0
        %668 = vmatpush1.msra.mxu0 0.0
        %669 = vmatprep.subr.mxu0 0.0
        %670 = vmatpush1.msra.mxu0 0.0
        %671 = vmatprep.subr.mxu0 0.0
        %672 = vmatpush1.msra.mxu0 0.0
        %673 = vmatprep.subr.mxu0 0.0
        %674 = vmatpush1.msra.mxu0 0.0
        %675 = vmatprep.subr.mxu0 0.0
        %676 = vmatpush1.msra.mxu0 0.0
        %677 = vmatprep.subr.mxu0 0.0
        %678 = vmatpush1.msra.mxu0 0.0
        %679 = vmatprep.subr.mxu0 0.0
        %680 = vmatpush1.msra.mxu0 0.0
        %681 = vmatprep.subr.mxu0 0.0
        %682 = vmatpush1.msra.mxu0 0.0
        %683 = vmatprep.subr.mxu0 0.0
        %684 = vmatpush1.msra.mxu0 0.0
        %685 = vmatprep.subr.mxu0 0.0
        %686 = vmatpush1.msra.mxu0 0.0
        %687 = vmatprep.subr.mxu0 0.0
        %688 = vmatpush1.msra.mxu0 0.0
        %689 = vmatprep.subr.mxu0 0.0
        %690 = vmatpush1.msra.mxu0 0.0
        %691 = vmatprep.subr.mxu0 0.0
        %692 = vmatpush1.msra.mxu0 0.0
        %693 = vmatprep.subr.mxu0 0.0
        %694 = vmatpush1.msra.mxu0 0.0
        %695 = vmatprep.subr.mxu0 0.0
        %696 = vmatpush1.msra.mxu0 0.0
        %697 = vmatprep.subr.mxu0 0.0
        %698 = vmatpush1.msra.mxu0 0.0
        %699 = vmatprep.subr.mxu0 0.0
        %700 = vmatpush1.msra.mxu0 0.0
        %701 = vmatprep.subr.mxu0 0.0
        %702 = vmatpush1.msra.mxu0 0.0
        %703 = vmatprep.subr.mxu0 0.0
        %704 = vmatpush1.msra.mxu0 0.0
        %705 = vmatprep.subr.mxu0 0.0
        %706 = vmatpush1.msra.mxu0 0.0
        %707 = vmatprep.subr.mxu0 0.0
        %708 = vmatpush1.msra.mxu0 0.0
        %709 = vmatprep.subr.mxu0 0.0
        %710 = vmatpush1.msra.mxu0 0.0
        %711 = vmatprep.subr.mxu0 0.0
        %712 = vmatpush1.msra.mxu0 0.0
        %713 = vmatprep.subr.mxu0 0.0
        %714 = vmatpush1.msra.mxu0 0.0
        %715 = vmatprep.subr.mxu0 0.0
        %716 = vmatpush1.msra.mxu0 0.0
        %717 = vmatprep.subr.mxu0 0.0
        %718 = vmatpush1.msra.mxu0 0.0
        %719 = vmatprep.subr.mxu0 0.0
        %720 = vmatpush1.msra.mxu0 0.0
        %721 = vmatprep.subr.mxu0 0.0
        %722 = vmatpush1.msra.mxu0 0.0
        %723 = vmatprep.subr.mxu0 0.0
        %724 = vmatpush1.msra.mxu0 0.0
        %725 = vmatprep.subr.mxu0 0.0
        %726 = vmatpush1.msra.mxu0 0.0
        %727 = vmatprep.mubr.f32.mxu0 0.0
        %v728 = vand.u32 %v240, 4294901760
        %729 = vmatmul.mubr.f32.gmra.mrb[0].mxu0 %v728
        %v730 = vpop.f32.mrb[0].mxu0
        %v731 = vadd.f32 %v630, %v730
        %v732 = vpop.f32.mrb[0].mxu0
        %733 = vmatprep.mubr.f32.mxu0 0.0
        %v734 = vand.u32 %v243, 4294901760
        %735 = vmatmul.mubr.f32.gmra.mrb[0].mxu0 %v734
        %v736 = vpop.f32.mrb[0].mxu0
        %v737 = vadd.f32 %v638, %v736
        %v738 = vpop.f32.mrb[0].mxu0
        %739 = vmatprep.mubr.f32.mxu0 0.0
        %v740 = vand.u32 %v246, 4294901760
        %741 = vmatmul.mubr.f32.gmra.mrb[0].mxu0 %v740
        %v742 = vpop.f32.mrb[0].mxu0
        %v743 = vadd.f32 %v646, %v742
        %v744 = vpop.f32.mrb[0].mxu0
        %745 = vmatprep.mubr.f32.mxu0 0.0
        %v746 = vand.u32 %v249, 4294901760
        %747 = vmatmul.mubr.f32.gmra.mrb[0].mxu0 %v746
        %v748 = vpop.f32.mrb[0].mxu0
        %v749 = vadd.f32 %v654, %v748
        %v750 = vpop.f32.mrb[0].mxu0
        %751 = vdwg.mxu0
        %752 = vmatprep.subr.mxu0 0.0
        %v753 = vand.u32 %v236, 4294901760
        %754 = vmatpush1.msra.mxu0 %v753
        %755 = vmatprep.subr.mxu0 0.0
        %v756 = vand.u32 %v253, 4294901760
        %757 = vmatpush1.msra.mxu0 %v756
        %758 = vmatprep.subr.mxu0 0.0
        %759 = vmatpush1.msra.mxu0 0.0
        %760 = vmatprep.subr.mxu0 0.0
        %761 = vmatpush1.msra.mxu0 0.0
        %762 = vmatprep.subr.mxu0 0.0
        %763 = vmatpush1.msra.mxu0 0.0
        %764 = vmatprep.subr.mxu0 0.0
        %765 = vmatpush1.msra.mxu0 0.0
        %766 = vmatprep.subr.mxu0 0.0
        %767 = vmatpush1.msra.mxu0 0.0
        %768 = vmatprep.subr.mxu0 0.0
        %769 = vmatpush1.msra.mxu0 0.0
        %770 = vmatprep.subr.mxu0 0.0
        %771 = vmatpush1.msra.mxu0 0.0
        %772 = vmatprep.subr.mxu0 0.0
        %773 = vmatpush1.msra.mxu0 0.0
        %774 = vmatprep.subr.mxu0 0.0
        %775 = vmatpush1.msra.mxu0 0.0
        %776 = vmatprep.subr.mxu0 0.0
        %777 = vmatpush1.msra.mxu0 0.0
        %778 = vmatprep.subr.mxu0 0.0
        %779 = vmatpush1.msra.mxu0 0.0
        %780 = vmatprep.subr.mxu0 0.0
        %781 = vmatpush1.msra.mxu0 0.0
        %782 = vmatprep.subr.mxu0 0.0
        %783 = vmatpush1.msra.mxu0 0.0
        %784 = vmatprep.subr.mxu0 0.0
        %785 = vmatpush1.msra.mxu0 0.0
        %786 = vmatprep.subr.mxu0 0.0
        %787 = vmatpush1.msra.mxu0 0.0
        %788 = vmatprep.subr.mxu0 0.0
        %789 = vmatpush1.msra.mxu0 0.0
        %790 = vmatprep.subr.mxu0 0.0
        %791 = vmatpush1.msra.mxu0 0.0
        %792 = vmatprep.subr.mxu0 0.0
        %793 = vmatpush1.msra.mxu0 0.0
        %794 = vmatprep.subr.mxu0 0.0
        %795 = vmatpush1.msra.mxu0 0.0
        %796 = vmatprep.subr.mxu0 0.0
        %797 = vmatpush1.msra.mxu0 0.0
        %798 = vmatprep.subr.mxu0 0.0
        %799 = vmatpush1.msra.mxu0 0.0
        %800 = vmatprep.subr.mxu0 0.0
        %801 = vmatpush1.msra.mxu0 0.0
        %802 = vmatprep.subr.mxu0 0.0
        %803 = vmatpush1.msra.mxu0 0.0
        %804 = vmatprep.subr.mxu0 0.0
        %805 = vmatpush1.msra.mxu0 0.0
        %806 = vmatprep.subr.mxu0 0.0
        %807 = vmatpush1.msra.mxu0 0.0
        %808 = vmatprep.subr.mxu0 0.0
        %809 = vmatpush1.msra.mxu0 0.0
        %810 = vmatprep.subr.mxu0 0.0
        %811 = vmatpush1.msra.mxu0 0.0
        %812 = vmatprep.subr.mxu0 0.0
        %813 = vmatpush1.msra.mxu0 0.0
        %814 = vmatprep.subr.mxu0 0.0
        %815 = vmatpush1.msra.mxu0 0.0
        %816 = vmatprep.subr.mxu0 0.0
        %817 = vmatpush1.msra.mxu0 0.0
        %818 = vmatprep.mubr.f32.mxu0 0.0
        %v819 = vand.u32 %v240, 4294901760
        %820 = vmatmul.mubr.f32.gmra.mrb[0].mxu0 %v819
        %v821 = vpop.f32.mrb[0].mxu0
        %v822 = vadd.f32 %v731, %v821
        %v823 = vpop.f32.mrb[0].mxu0
        %824 = vmatprep.mubr.f32.mxu0 0.0
        %v825 = vand.u32 %v243, 4294901760
        %826 = vmatmul.mubr.f32.gmra.mrb[0].mxu0 %v825
        %v827 = vpop.f32.mrb[0].mxu0
        %v828 = vadd.f32 %v737, %v827
        %v829 = vpop.f32.mrb[0].mxu0
        %830 = vmatprep.mubr.f32.mxu0 0.0
        %v831 = vand.u32 %v246, 4294901760
        %832 = vmatmul.mubr.f32.gmra.mrb[0].mxu0 %v831
        %v833 = vpop.f32.mrb[0].mxu0
        %v834 = vadd.f32 %v743, %v833
        %v835 = vpop.f32.mrb[0].mxu0
        %836 = vmatprep.mubr.f32.mxu0 0.0
        %v837 = vand.u32 %v249, 4294901760
        %838 = vmatmul.mubr.f32.gmra.mrb[0].mxu0 %v837
        %v839 = vpop.f32.mrb[0].mxu0
        %v840 = vadd.f32 %v749, %v839
        %v841 = vpop.f32.mrb[0].mxu0
        %842 = vdwg.mxu0
        %vm843 = vcmask 64512
        %844 = vst.msk [vmem:[%s190] sm:$0xff] %vm843, %v822
        %845 = vst.msk [vmem:[%s190 + $0x8] sm:$0xff] %vm843, %v828
        %846 = vst.msk [vmem:[%s190 + $0x10] sm:$0xff] %vm843, %v834
        %847 = vst.msk [vmem:[%s190 + $0x18] sm:$0xff] %vm843, %v840
        %s848 = smul.u32 4, %s21
        %p849 = scmp.lt.s32.totalorder %s20, 1
        %s850 = scalar_select %p849, %s20, 1
        %p851 = scmp.lt.s32.totalorder %s848, 3
        %s852 = scalar_select %p851, %s848, 3
        %s853 = smul.addr %s850, 4
        %s854 = sadd.s32 %s852, %s853
        %s855 = smul.addr %s854, 8
        %s856 = scalar_lea.vmem %s2, %s855
        // Predicated region
        $region33: #{tpu_custom_call.1} parent=27 // pred_check
          %p857 = pneg %p97
        $region34: #{tpu_custom_call.1} parent=27 // pred_check_branch
          %859 = sbr.rel (%p857) target = $region36
        $region35: #{tpu_custom_call.1} parent=27 // pred_region
          %s860 = smul.u32 4, %s21
        $region36: #{tpu_custom_call.1} parent=27 // pred_fallthru
          _
      $region28: #{tpu_custom_call.1} parent=5 // pred_fallthru
        _
      %p861 = scmp.le.s32.totalorder 2, %s11
      // Predicated region
      $region37: #{tpu_custom_call.1} parent=5 // pred_check
        %p862 = pneg %p861
      $region38: #{tpu_custom_call.1} parent=5 // pred_check_branch
        %864 = sbr.rel (%p862) target = $region40
      $region39: #{tpu_custom_call.1} parent=5 // pred_region
        %s865 = ssub.s32 %s11, 2
        // Predicated region
        $region41: #{tpu_custom_call.1} parent=39 // pred_check
          %p866 = pneg %p103
        $region42: #{tpu_custom_call.1} parent=39 // pred_check_branch
          %868 = sbr.rel (%p866) target = $region44
        $region43: #{tpu_custom_call.1} parent=39 // pred_region
          %s869 = smul.u32 4, %s23
          %p870 = scmp.lt.s32.totalorder %s22, 1
          %s871 = scalar_select %p870, %s22, 1
          %p872 = scmp.lt.s32.totalorder %s869, 3
          %s873 = scalar_select %p872, %s869, 3
          %s874 = smul.addr %s871, 4
          %s875 = sadd.s32 %s873, %s874
          %s876 = smul.addr %s875, 8
          %s877 = scalar_lea.vmem %s2, %s876
        $region44: #{tpu_custom_call.1} parent=39 // pred_fallthru
          _
      $region40: #{tpu_custom_call.1} parent=5 // pred_fallthru
        _
    $region6: #{tpu_custom_call.1} parent=1 // loop_footer
      %s15 = sadd.s32 1, %s11
    $region7: #{tpu_custom_call.1} parent=1 // loop_footer_branch
      %10 = sbr.rel target = $region3
    $region8: #{tpu_custom_call.1} parent=1 // loop_exit
      _
    %878 = vsyncpa [#allocation3], 1
    %s879 = scalar_lea.sflag [#allocation3], 1
    %880 = vsyncpa %s879, 1

</llo_original>
